<compile_context>
chip_gen: v7x
topology: tpu7x:2x2x1
jax: 0.10.0
libtpu: 0.0.40
codegen_flags: <defaults>
</compile_context>

<pallas_src>
import functools

import jax
import jax.numpy as jnp
from jax.experimental import pallas as pl
from jax.experimental.pallas import tpu as pltpu  # noqa: F401  (used when row-tiling at scale)


LANE = 128  # pad node dim and all feature/class dims to this (lane-dense everywhere)


def _round_up(v, m):
    return (v + m - 1) // m * m


# ----------------------------------------------------------------------------
# Pallas kernel: the whole GCN stack, fused
# ----------------------------------------------------------------------------
def _gcn_fused_kernel(a_ref, x_ref, w_ref, o_ref, *, n_layers_total):
    a = a_ref[...]                 # bf16 [Np, Np] normalized adjacency, loaded once
    h = x_ref[...]                 # bf16 [Np, Dp] node features

    for i in range(n_layers_total):
        w = w_ref[i]               # static slice of stacked weights: bf16 [Dp, Dp]
        # Feature transform: [Np, Dp] @ [Dp, Dp] -> f32      (MXU, bf16 inputs)
        xw = jnp.dot(h, w, preferred_element_type=jnp.float32)
        # Aggregation with normalized adjacency: [Np, Np] @ [Np, Dp]   (MXU)
        hf = jnp.dot(a, xw.astype(jnp.bfloat16), preferred_element_type=jnp.float32)
        if i < n_layers_total - 1:
            hf = jnp.maximum(hf, 0.0)      # ReLU on the f32 accumulator (v5e-safe)
            # TODO(synk): training-mode dropout would go here; identity in eval.
            h = hf.astype(jnp.bfloat16)    # feed next layer's MXU in bf16
        else:
            o_ref[...] = hf.astype(jnp.bfloat16)   # lane-dense bf16 store


# ----------------------------------------------------------------------------
# One-time input preparation (hoisted out of the per-call path)
# ----------------------------------------------------------------------------
def prepare_padded_inputs(a_norm, features, weights):
    """Pad to TPU-friendly shapes and cast to bf16. Call ONCE, reuse the results."""
    n = a_norm.shape[0]
    f_in = features.shape[1]
    n_p = _round_up(n, LANE)

    # One common padded feature dim so all layer weights stack into [L, Dp, Dp].
    d_p = _round_up(f_in, LANE)
    for w in weights:
        d_p = max(d_p, _round_up(w.shape[0], LANE), _round_up(w.shape[1], LANE))

    # Zero rows/cols are inert: zero features, zero adjacency, zero weight rows.
    a_p = jnp.zeros((n_p, n_p), jnp.bfloat16).at[:n, :n].set(
        a_norm.astype(jnp.bfloat16))
    x_p = jnp.zeros((n_p, d_p), jnp.bfloat16).at[:n, :f_in].set(
        features.astype(jnp.bfloat16))

    w_stack = jnp.zeros((len(weights), d_p, d_p), jnp.bfloat16)
    for i, w in enumerate(weights):
        di, do = w.shape
        w_stack = w_stack.at[i, :di, :do].set(w.astype(jnp.bfloat16))

    return a_p, x_p, w_stack


# ----------------------------------------------------------------------------
# Jitted forward: single pallas_call + slice (no padding/casting in this path)
# ----------------------------------------------------------------------------
@functools.partial(jax.jit, static_argnames=("n", "n_classes"))
def gcn_forward(a_p, x_p, w_stack, *, n, n_classes):
    n_p = a_p.shape[0]
    d_p = w_stack.shape[-1]
    n_layers_total = w_stack.shape[0]

    kernel = functools.partial(_gcn_fused_kernel, n_layers_total=n_layers_total)

    out_p = pl.pallas_call(
        kernel,
        out_shape=jax.ShapeDtypeStruct((n_p, d_p), jnp.bfloat16),
        # Small problem: whole (padded) arrays are single VMEM blocks, no grid.
        in_specs=[pl.BlockSpec(a_p.shape, lambda: (0, 0)),
                  pl.BlockSpec(x_p.shape, lambda: (0, 0)),
                  pl.BlockSpec(w_stack.shape, lambda: (0, 0, 0))],
        out_specs=pl.BlockSpec((n_p, d_p), lambda: (0, 0)),
    )(a_p, x_p, w_stack)

    return out_p[:n, :n_classes].astype(jnp.float32)


# ----------------------------------------------------------------------------
# Deterministic parameter / graph construction
# ----------------------------------------------------------------------------
def build_weights(key, in_feats, n_hidden, n_classes, n_layers):
    dims = [in_feats] + [n_hidden] * n_layers + [n_classes]
    weights = []
    for i in range(len(dims) - 1):
        key, sub = jax.random.split(key)
        fan_in, fan_out = dims[i], dims[i + 1]
        # Glorot-uniform init (matches DGL GraphConv default reset_parameters).
        limit = (6.0 / (fan_in + fan_out)) ** 0.5
        w = jax.random.uniform(sub, (fan_in, fan_out), jnp.float32, -limit, limit)
        weights.append(w)
    return weights


def build_normalized_adjacency(key, n_nodes):
    # Random undirected graph with self-loops, symmetric D^{-1/2} A D^{-1/2} norm.
    logits = jax.random.uniform(key, (n_nodes, n_nodes), jnp.float32)
    a = (logits + logits.T > 1.2).astype(jnp.float32)
    a = a + jnp.eye(n_nodes, dtype=jnp.float32)
    a = jnp.minimum(a, 1.0)
    deg = jnp.sum(a, axis=1)
    inv_sqrt = jnp.where(deg > 0, 1.0 / jnp.sqrt(deg), 0.0)
    return inv_sqrt[:, None] * a * inv_sqrt[None, :]


# ----------------------------------------------------------------------------
# Main
# ----------------------------------------------------------------------------
if __name__ == "__main__":
    key = jax.random.PRNGKey(0)
    k_feat, k_graph, k_w = jax.random.split(key, 3)

    n_nodes = 16     # number of graph nodes
    in_feats = 8     # input feature dim
    n_hidden = 32    # hidden dim
    n_classes = 4    # output classes
    n_layers = 2     # -> total GraphConv layers = n_layers + 1 = 3

    features = jax.random.normal(k_feat, (n_nodes, in_feats), jnp.float32)
    a_norm = build_normalized_adjacency(k_graph, n_nodes)
    weights = build_weights(k_w, in_feats, n_hidden, n_classes, n_layers)

    # One-time padding/casting, kept out of the per-call path.
    a_p, x_p, w_stack = jax.block_until_ready(
        prepare_padded_inputs(a_norm, features, weights))

    out = gcn_forward(a_p, x_p, w_stack, n=n_nodes, n_classes=n_classes)
    out = jax.block_until_ready(out)
    assert out.shape == (n_nodes, n_classes)

    # Reference 1: bf16-matched math (same casts as the kernel), f32 accumulation,
    # final bf16 rounding to match the kernel's bf16 output store.
    hp = jax.lax.Precision.HIGHEST
    a32 = a_norm.astype(jnp.bfloat16).astype(jnp.float32)
    h_ref = features.astype(jnp.bfloat16).astype(jnp.float32)
    for i, w in enumerate(weights):
        w32 = w.astype(jnp.bfloat16).astype(jnp.float32)
        xw = jnp.dot(h_ref, w32, precision=hp)
        h_ref = jnp.dot(a32, xw.astype(jnp.bfloat16).astype(jnp.float32), precision=hp)
        if i < len(weights) - 1:
            h_ref = jnp.maximum(h_ref, 0.0)
            h_ref = h_ref.astype(jnp.bfloat16).astype(jnp.float32)
    h_ref = h_ref.astype(jnp.bfloat16).astype(jnp.float32)
    assert jnp.allclose(out, h_ref, atol=2e-2, rtol=2e-2)

    # Reference 2: pure f32 math (loose tolerance: kernel uses bf16 MXU inputs
    # and a bf16 output store — deliberate precision trade for OCGNN inference).
    h32 = features
    for i, w in enumerate(weights):
        h32 = a_norm @ (h32 @ w)
        if i < len(weights) - 1:
            h32 = jnp.maximum(h32, 0.0)
    assert jnp.allclose(out, h32, atol=7e-2, rtol=7e-2)

    print("KERNEL_OK")
</pallas_src>

<mosaic_0001>
module attributes {stable_mosaic.version = 11 : i64} {
  func.func @_gcn_fused_kernel(%arg0: memref<128x128xbf16, #tpu.memory_space<vmem>>, %arg1: memref<128x128xbf16, #tpu.memory_space<vmem>>, %arg2: memref<3x128x128xbf16, #tpu.memory_space<vmem>>, %arg3: memref<128x128xbf16, #tpu.memory_space<vmem>>) attributes {dimension_semantics = [], scalar_prefetch = 0 : i64, scratch_operands = 0 : i64, tpu.core_type = #tpu.core_type<tc>} {
    %c0 = arith.constant 0 : index
    %c0_0 = arith.constant 0 : index
    %0 = vector.load %arg0[%c0, %c0_0] : memref<128x128xbf16, #tpu.memory_space<vmem>>, vector<128x128xbf16>
    %c0_1 = arith.constant 0 : index
    %c0_2 = arith.constant 0 : index
    %1 = vector.load %arg1[%c0_1, %c0_2] : memref<128x128xbf16, #tpu.memory_space<vmem>>, vector<128x128xbf16>
    %c0_3 = arith.constant 0 : index
    %c0_4 = arith.constant 0 : index
    %c0_5 = arith.constant 0 : index
    %2 = vector.load %arg2[%c0_3, %c0_4, %c0_5] : memref<3x128x128xbf16, #tpu.memory_space<vmem>>, vector<1x128x128xbf16>
    %3 = vector.shape_cast %2 : vector<1x128x128xbf16> to vector<128x128xbf16>
    %cst = arith.constant dense<0.000000e+00> : vector<128x128xf32>
    %4 = tpu.matmul %1, %3, %cst {dimension_numbers = #tpu.dot_dimension_numbers<[1], [0], [0], [1], [0, 0, 1, 1], [], []>} : vector<128x128xbf16>, vector<128x128xbf16>, vector<128x128xf32> -> vector<128x128xf32>
    %5 = arith.truncf %4 : vector<128x128xf32> to vector<128x128xbf16>
    %cst_6 = arith.constant dense<0.000000e+00> : vector<128x128xf32>
    %6 = tpu.matmul %0, %5, %cst_6 {dimension_numbers = #tpu.dot_dimension_numbers<[1], [0], [0], [1], [0, 0, 1, 1], [], []>} : vector<128x128xbf16>, vector<128x128xbf16>, vector<128x128xf32> -> vector<128x128xf32>
    %cst_7 = arith.constant 0.000000e+00 : f32
    %7 = vector.broadcast %cst_7 : f32 to vector<128x128xf32>
    %8 = arith.maximumf %6, %7 : vector<128x128xf32>
    %9 = arith.truncf %8 : vector<128x128xf32> to vector<128x128xbf16>
    %c1 = arith.constant 1 : index
    %c0_8 = arith.constant 0 : index
    %c0_9 = arith.constant 0 : index
    %10 = vector.load %arg2[%c1, %c0_8, %c0_9] : memref<3x128x128xbf16, #tpu.memory_space<vmem>>, vector<1x128x128xbf16>
    %11 = vector.shape_cast %10 : vector<1x128x128xbf16> to vector<128x128xbf16>
    %cst_10 = arith.constant dense<0.000000e+00> : vector<128x128xf32>
    %12 = tpu.matmul %9, %11, %cst_10 {dimension_numbers = #tpu.dot_dimension_numbers<[1], [0], [0], [1], [0, 0, 1, 1], [], []>} : vector<128x128xbf16>, vector<128x128xbf16>, vector<128x128xf32> -> vector<128x128xf32>
    %13 = arith.truncf %12 : vector<128x128xf32> to vector<128x128xbf16>
    %cst_11 = arith.constant dense<0.000000e+00> : vector<128x128xf32>
    %14 = tpu.matmul %0, %13, %cst_11 {dimension_numbers = #tpu.dot_dimension_numbers<[1], [0], [0], [1], [0, 0, 1, 1], [], []>} : vector<128x128xbf16>, vector<128x128xbf16>, vector<128x128xf32> -> vector<128x128xf32>
    %cst_12 = arith.constant 0.000000e+00 : f32
    %15 = vector.broadcast %cst_12 : f32 to vector<128x128xf32>
    %16 = arith.maximumf %14, %15 : vector<128x128xf32>
    %17 = arith.truncf %16 : vector<128x128xf32> to vector<128x128xbf16>
    %c2 = arith.constant 2 : index
    %c0_13 = arith.constant 0 : index
    %c0_14 = arith.constant 0 : index
    %18 = vector.load %arg2[%c2, %c0_13, %c0_14] : memref<3x128x128xbf16, #tpu.memory_space<vmem>>, vector<1x128x128xbf16>
    %19 = vector.shape_cast %18 : vector<1x128x128xbf16> to vector<128x128xbf16>
    %cst_15 = arith.constant dense<0.000000e+00> : vector<128x128xf32>
    %20 = tpu.matmul %17, %19, %cst_15 {dimension_numbers = #tpu.dot_dimension_numbers<[1], [0], [0], [1], [0, 0, 1, 1], [], []>} : vector<128x128xbf16>, vector<128x128xbf16>, vector<128x128xf32> -> vector<128x128xf32>
    %21 = arith.truncf %20 : vector<128x128xf32> to vector<128x128xbf16>
    %cst_16 = arith.constant dense<0.000000e+00> : vector<128x128xf32>
    %22 = tpu.matmul %0, %21, %cst_16 {dimension_numbers = #tpu.dot_dimension_numbers<[1], [0], [0], [1], [0, 0, 1, 1], [], []>} : vector<128x128xbf16>, vector<128x128xbf16>, vector<128x128xf32> -> vector<128x128xf32>
    %23 = arith.truncf %22 : vector<128x128xf32> to vector<128x128xbf16>
    %c0_17 = arith.constant 0 : index
    %c0_18 = arith.constant 0 : index
    %24 = vector.load %arg3[%c0_17, %c0_18] : memref<128x128xbf16, #tpu.memory_space<vmem>>, vector<128x128xbf16>
    tpu.vector_store %arg3[%c0_17, %c0_18], %23 {strides = array<i32>} : memref<128x128xbf16, #tpu.memory_space<vmem>>, vector<128x128xbf16>,
    return
  }
}

</mosaic_0001>

<llo_original>
// kernel: gcn_forward.1
$region0: #{gcn_forward.1}
  #allocation0 [shape = 'u32[]', space=smem, size = 0x4, offset = 0x4, fixed_abs, tag = 'smem constant byte address 0x4 - core index']
  #allocation1 [shape = 'u32[144,128]{1,0:T(1,128)}', space=vmem, size = 0x12000, scoped, tag = 'internal scratch']
  %s0 = inlined_call_operand.hbm [shape: bf16[128,128], index: 0, kind: input, shape index: {}]
  %s1 = inlined_call_operand.hbm [shape: bf16[128,128], index: 1, kind: input, shape index: {}]
  %s2 = inlined_call_operand.hbm [shape: bf16[3,128,128], index: 2, kind: input, shape index: {}]
  %s3 = inlined_call_operand.vmem [shape: bf16[128,128], index: 3, kind: output, shape index: {}]
  %s4 = sld [smem:[#allocation0]]
  $region34: #{gcn_forward.1} parent=0
    _
  %s6 = ssub.s32 1, %s4
  %s7 = scalar_select 0, %s6, %s4
  $region1: #{gcn_forward.1} parent=0
    #allocation2 [shape = 'u8[32768]{0}', space=vmem, size = 0x8000, scoped, tag = 'input window, operand 0, single buffered']
    #allocation3 [shape = 's32[1]{0}', space=sflag, size = 0x4, scoped, tag = 'scoped memory for gcn_forward.1']
    #allocation4 [shape = 'u8[32768]{0}', space=vmem, size = 0x8000, scoped, tag = 'input window, operand 1, single buffered']
    #allocation5 [shape = 's32[1]{0}', space=sflag, size = 0x4, scoped, tag = 'scoped memory for gcn_forward.1']
    #allocation6 [shape = 'u8[98304]{0}', space=vmem, size = 0x18000, scoped, tag = 'input window, operand 2, single buffered']
    %8 = vsyncpa [#allocation3], 0
    %9 = vsyncpa [#allocation5], 0
    // Predicated region
    $region2: #{gcn_forward.1} parent=1 // pred_check
      _
    $region3: #{gcn_forward.1} parent=1 // pred_check_branch
      %11 = sbr.rel (0) target = $region5
    $region4: #{gcn_forward.1} parent=1 // pred_region
      %s13 = ssub.s32 1024, 1024
      %14 = vsyncadd [#allocation3], %s13
      %s15 = sshll.u32 [#allocation2], 4
      %s16 = int_to_ptr.vmem [resolvable:$true] %s15
      %21 = dma.hbm_to_vmem [thread:$0]  %s0, 1024, %s16, [#allocation3], 64, 64, 4
    $region5: #{gcn_forward.1} parent=1 // pred_fallthru
      _
    // Predicated region
    $region6: #{gcn_forward.1} parent=1 // pred_check
      _
    $region7: #{gcn_forward.1} parent=1 // pred_check_branch
      %23 = sbr.rel (0) target = $region9
    $region8: #{gcn_forward.1} parent=1 // pred_region
      %s25 = ssub.s32 1024, 1024
      %26 = vsyncadd [#allocation5], %s25
      %s27 = sshll.u32 [#allocation4], 4
      %s28 = int_to_ptr.vmem [resolvable:$true] %s27
      %33 = dma.hbm_to_vmem [thread:$0]  %s1, 1024, %s28, [#allocation5], 64, 64, 4
    $region9: #{gcn_forward.1} parent=1 // pred_fallthru
      _
    // Predicated region
    $region10: #{gcn_forward.1} parent=1 // pred_check
      _
    $region11: #{gcn_forward.1} parent=1 // pred_check_branch
      %35 = sbr.rel (0) target = $region13
    $region12: #{gcn_forward.1} parent=1 // pred_region
      %s37 = ssub.s32 3072, 3072
      %38 = vsyncadd [#allocation5], %s37
      %s39 = sshll.u32 [#allocation6], 4
      %s40 = int_to_ptr.vmem [resolvable:$true] %s39
      %45 = dma.hbm_to_vmem [thread:$0]  %s2, 3072, %s40, [#allocation5], 64, 64, 4
    $region13: #{gcn_forward.1} parent=1 // pred_fallthru
      _
    // Predicated region
    $region14: #{gcn_forward.1} parent=1 // pred_check
      _
    $region15: #{gcn_forward.1} parent=1 // pred_check_branch
      %47 = sbr.rel (0) target = $region17
    $region16: #{gcn_forward.1} parent=1 // pred_region
      %48 = dma.done [#allocation3], 1024
    $region17: #{gcn_forward.1} parent=1 // pred_fallthru
      _
    // Predicated region
    $region18: #{gcn_forward.1} parent=1 // pred_check
      _
    $region19: #{gcn_forward.1} parent=1 // pred_check_branch
      %50 = sbr.rel (0) target = $region21
    $region20: #{gcn_forward.1} parent=1 // pred_region
      %51 = dma.done [#allocation5], 1024
    $region21: #{gcn_forward.1} parent=1 // pred_fallthru
      _
    // Predicated region
    $region22: #{gcn_forward.1} parent=1 // pred_check
      _
    $region23: #{gcn_forward.1} parent=1 // pred_check_branch
      %53 = sbr.rel (0) target = $region25
    $region24: #{gcn_forward.1} parent=1 // pred_region
      %54 = dma.done [#allocation5], 3072
    $region25: #{gcn_forward.1} parent=1 // pred_fallthru
      _
    %v56 = vld [vmem:[#allocation2] sm:$0xf]
    %v57 = vld [vmem:[#allocation2 + $0x4] sm:$0xf]
    %v58 = vld [vmem:[#allocation2 + $0x8] sm:$0xf]
    %v59 = vld [vmem:[#allocation2 + $0xc] sm:$0xf]
    %v60 = vld [vmem:[#allocation2 + $0x10] sm:$0xf]
    %v61 = vld [vmem:[#allocation2 + $0x14] sm:$0xf]
    %v62 = vld [vmem:[#allocation2 + $0x18] sm:$0xf]
    %v63 = vld [vmem:[#allocation2 + $0x1c] sm:$0xf]
    %v64 = vld [vmem:[#allocation2 + $0x20] sm:$0xf]
    %v65 = vld [vmem:[#allocation2 + $0x24] sm:$0xf]
    %v66 = vld [vmem:[#allocation2 + $0x28] sm:$0xf]
    %v67 = vld [vmem:[#allocation2 + $0x2c] sm:$0xf]
    %v68 = vld [vmem:[#allocation2 + $0x30] sm:$0xf]
    %v69 = vld [vmem:[#allocation2 + $0x34] sm:$0xf]
    %v70 = vld [vmem:[#allocation2 + $0x38] sm:$0xf]
    %v71 = vld [vmem:[#allocation2 + $0x3c] sm:$0xf]
    %v72 = vld [vmem:[#allocation4] sm:$0xf]
    %v73 = vld [vmem:[#allocation4 + $0x4] sm:$0xf]
    %v74 = vld [vmem:[#allocation4 + $0x8] sm:$0xf]
    %v75 = vld [vmem:[#allocation4 + $0xc] sm:$0xf]
    %v76 = vld [vmem:[#allocation4 + $0x10] sm:$0xf]
    %v77 = vld [vmem:[#allocation4 + $0x14] sm:$0xf]
    %v78 = vld [vmem:[#allocation4 + $0x18] sm:$0xf]
    %v79 = vld [vmem:[#allocation4 + $0x1c] sm:$0xf]
    %v80 = vld [vmem:[#allocation4 + $0x20] sm:$0xf]
    %v81 = vld [vmem:[#allocation4 + $0x24] sm:$0xf]
    %v82 = vld [vmem:[#allocation4 + $0x28] sm:$0xf]
    %v83 = vld [vmem:[#allocation4 + $0x2c] sm:$0xf]
    %v84 = vld [vmem:[#allocation4 + $0x30] sm:$0xf]
    %v85 = vld [vmem:[#allocation4 + $0x34] sm:$0xf]
    %v86 = vld [vmem:[#allocation4 + $0x38] sm:$0xf]
    %v87 = vld [vmem:[#allocation4 + $0x3c] sm:$0xf]
    %v88 = vld [vmem:[#allocation6] sm:$0xf]
    %v89 = vld [vmem:[#allocation6 + $0x4] sm:$0xf]
    %v90 = vld [vmem:[#allocation6 + $0x8] sm:$0xf]
    %v91 = vld [vmem:[#allocation6 + $0xc] sm:$0xf]
    %v92 = vld [vmem:[#allocation6 + $0x10] sm:$0xf]
    %v93 = vld [vmem:[#allocation6 + $0x14] sm:$0xf]
    %v94 = vld [vmem:[#allocation6 + $0x18] sm:$0xf]
    %v95 = vld [vmem:[#allocation6 + $0x1c] sm:$0xf]
    %v96 = vld [vmem:[#allocation6 + $0x20] sm:$0xf]
    %v97 = vld [vmem:[#allocation6 + $0x24] sm:$0xf]
    %v98 = vld [vmem:[#allocation6 + $0x28] sm:$0xf]
    %v99 = vld [vmem:[#allocation6 + $0x2c] sm:$0xf]
    %v100 = vld [vmem:[#allocation6 + $0x30] sm:$0xf]
    %v101 = vld [vmem:[#allocation6 + $0x34] sm:$0xf]
    %v102 = vld [vmem:[#allocation6 + $0x38] sm:$0xf]
    %v103 = vld [vmem:[#allocation6 + $0x3c] sm:$0xf]
    %v120 = vunpack.c.l.b16 %v72
    %v121 = vunpack.c.l.b16 %v73
    %v122 = vunpack.c.l.b16 %v74
    %v123 = vunpack.c.l.b16 %v75
    %v124 = vunpack.c.l.b16 %v76
    %v125 = vunpack.c.l.b16 %v77
    %v126 = vunpack.c.l.b16 %v78
    %v127 = vunpack.c.l.b16 %v79
    %v128 = vunpack.c.l.b16 %v80
    %v129 = vunpack.c.l.b16 %v81
    %v130 = vunpack.c.l.b16 %v82
    %v131 = vunpack.c.l.b16 %v83
    %v132 = vunpack.c.l.b16 %v84
    %v133 = vunpack.c.l.b16 %v85
    %v134 = vunpack.c.l.b16 %v86
    %v135 = vunpack.c.l.b16 %v87
    %v136 = vpack.c.b16 %v121, %v120
    %v137 = vpack.c.b16 %v123, %v122
    %v138 = vpack.c.b16 %v125, %v124
    %v139 = vpack.c.b16 %v127, %v126
    %v140 = vpack.c.b16 %v129, %v128
    %v141 = vpack.c.b16 %v131, %v130
    %v142 = vpack.c.b16 %v133, %v132
    %v143 = vpack.c.b16 %v135, %v134
    %v168 = vunpack.c.l.b16 %v88
    %v169 = vunpack.c.l.b16 %v89
    %v170 = vunpack.c.l.b16 %v90
    %v171 = vunpack.c.l.b16 %v91
    %v172 = vunpack.c.l.b16 %v92
    %v173 = vunpack.c.l.b16 %v93
    %v174 = vunpack.c.l.b16 %v94
    %v175 = vunpack.c.l.b16 %v95
    %v176 = vunpack.c.l.b16 %v96
    %v177 = vunpack.c.l.b16 %v97
    %v178 = vunpack.c.l.b16 %v98
    %v179 = vunpack.c.l.b16 %v99
    %v180 = vunpack.c.l.b16 %v100
    %v181 = vunpack.c.l.b16 %v101
    %v182 = vunpack.c.l.b16 %v102
    %v183 = vunpack.c.l.b16 %v103
    %v184 = vpack.c.b16 %v169, %v168
    %v185 = vpack.c.b16 %v171, %v170
    %v186 = vpack.c.b16 %v173, %v172
    %v187 = vpack.c.b16 %v175, %v174
    %v188 = vpack.c.b16 %v177, %v176
    %v189 = vpack.c.b16 %v179, %v178
    %v190 = vpack.c.b16 %v181, %v180
    %v191 = vpack.c.b16 %v183, %v182
    %200 = vmatprep.subr.bf16.mxu0 0
    %201 = vmatpush1.bf16.msra.mxu0 %v184
    %202 = vmatprep.subr.bf16.mxu0 0
    %203 = vmatpush1.bf16.msra.mxu0 %v185
    %204 = vmatprep.subr.bf16.mxu0 0
    %205 = vmatpush1.bf16.msra.mxu0 %v186
    %206 = vmatprep.subr.bf16.mxu0 0
    %207 = vmatpush1.bf16.msra.mxu0 %v187
    %208 = vmatprep.subr.bf16.mxu0 0
    %209 = vmatpush1.bf16.msra.mxu0 %v188
    %210 = vmatprep.subr.bf16.mxu0 0
    %211 = vmatpush1.bf16.msra.mxu0 %v189
    %212 = vmatprep.subr.bf16.mxu0 0
    %213 = vmatpush1.bf16.msra.mxu0 %v190
    %214 = vmatprep.subr.bf16.mxu0 0
    %215 = vmatpush1.bf16.msra.mxu0 %v191
    %216 = vmatprep.subr.bf16.mxu0 0
    %217 = vmatpush1.bf16.msra.mxu0 0
    %218 = vmatprep.subr.bf16.mxu0 0
    %219 = vmatpush1.bf16.msra.mxu0 0
    %220 = vmatprep.subr.bf16.mxu0 0
    %221 = vmatpush1.bf16.msra.mxu0 0
    %222 = vmatprep.subr.bf16.mxu0 0
    %223 = vmatpush1.bf16.msra.mxu0 0
    %224 = vmatprep.subr.bf16.mxu0 0
    %225 = vmatpush1.bf16.msra.mxu0 0
    %226 = vmatprep.subr.bf16.mxu0 0
    %227 = vmatpush1.bf16.msra.mxu0 0
    %228 = vmatprep.subr.bf16.mxu0 0
    %229 = vmatpush1.bf16.msra.mxu0 0
    %230 = vmatprep.subr.bf16.mxu0 0
    %231 = vmatpush1.bf16.msra.mxu0 0
    %232 = vmatprep.mubr.bf16.mxu0 0
    %233 = vmatmul.mubr.bf16.gmra.mrb[0].mxu0 %v136
    %v234 = vpop.f32.mrb[0].mxu0
    %v235 = vadd.f32 0.0, %v234
    %v236 = vpop.f32.mrb[0].mxu0
    %v237 = vpop.f32.mrb[0].mxu0
    %v238 = vadd.f32 0.0, %v237
    %v239 = vpop.f32.mrb[0].mxu0
    %240 = vmatprep.mubr.bf16.mxu0 0
    %241 = vmatmul.mubr.bf16.gmra.mrb[0].mxu0 %v137
    %v242 = vpop.f32.mrb[0].mxu0
    %v243 = vadd.f32 0.0, %v242
    %v244 = vpop.f32.mrb[0].mxu0
    %v245 = vpop.f32.mrb[0].mxu0
    %v246 = vadd.f32 0.0, %v245
    %v247 = vpop.f32.mrb[0].mxu0
    %248 = vmatprep.mubr.bf16.mxu0 0
    %249 = vmatmul.mubr.bf16.gmra.mrb[0].mxu0 %v138
    %v250 = vpop.f32.mrb[0].mxu0
    %v251 = vadd.f32 0.0, %v250
    %v252 = vpop.f32.mrb[0].mxu0
    %v253 = vpop.f32.mrb[0].mxu0
    %v254 = vadd.f32 0.0, %v253
    %v255 = vpop.f32.mrb[0].mxu0
    %256 = vmatprep.mubr.bf16.mxu0 0
    %257 = vmatmul.mubr.bf16.gmra.mrb[0].mxu0 %v139
    %v258 = vpop.f32.mrb[0].mxu0
    %v259 = vadd.f32 0.0, %v258
    %v260 = vpop.f32.mrb[0].mxu0
    %v261 = vpop.f32.mrb[0].mxu0
    %v262 = vadd.f32 0.0, %v261
    %v263 = vpop.f32.mrb[0].mxu0
    %264 = vmatprep.mubr.bf16.mxu0 0
    %265 = vmatmul.mubr.bf16.gmra.mrb[0].mxu0 %v140
    %v266 = vpop.f32.mrb[0].mxu0
    %v267 = vadd.f32 0.0, %v266
    %v268 = vpop.f32.mrb[0].mxu0
    %v269 = vpop.f32.mrb[0].mxu0
    %v270 = vadd.f32 0.0, %v269
    %v271 = vpop.f32.mrb[0].mxu0
    %272 = vmatprep.mubr.bf16.mxu0 0
    %273 = vmatmul.mubr.bf16.gmra.mrb[0].mxu0 %v141
    %v274 = vpop.f32.mrb[0].mxu0
    %v275 = vadd.f32 0.0, %v274
    %v276 = vpop.f32.mrb[0].mxu0
    %v277 = vpop.f32.mrb[0].mxu0
    %v278 = vadd.f32 0.0, %v277
    %v279 = vpop.f32.mrb[0].mxu0
    %280 = vmatprep.mubr.bf16.mxu0 0
    %281 = vmatmul.mubr.bf16.gmra.mrb[0].mxu0 %v142
    %v282 = vpop.f32.mrb[0].mxu0
    %v283 = vadd.f32 0.0, %v282
    %v284 = vpop.f32.mrb[0].mxu0
    %v285 = vpop.f32.mrb[0].mxu0
    %v286 = vadd.f32 0.0, %v285
    %v287 = vpop.f32.mrb[0].mxu0
    %288 = vmatprep.mubr.bf16.mxu0 0
    %289 = vmatmul.mubr.bf16.gmra.mrb[0].mxu0 %v143
    %v290 = vpop.f32.mrb[0].mxu0
    %v291 = vadd.f32 0.0, %v290
    %v292 = vpop.f32.mrb[0].mxu0
    %v293 = vpop.f32.mrb[0].mxu0
    %v294 = vadd.f32 0.0, %v293
    %v295 = vpop.f32.mrb[0].mxu0
    %296 = vdwg.mxu0
    %v297 = vpack.c.bf16 %v238, %v235
    %v298 = vpack.c.bf16 %v246, %v243
    %v299 = vpack.c.bf16 %v254, %v251
    %v300 = vpack.c.bf16 %v262, %v259
    %v301 = vpack.c.bf16 %v270, %v267
    %v302 = vpack.c.bf16 %v278, %v275
    %v303 = vpack.c.bf16 %v286, %v283
    %v304 = vpack.c.bf16 %v294, %v291
    %v321 = vunpack.c.l.b16 %v56
    %v322 = vunpack.c.l.b16 %v57
    %v323 = vunpack.c.l.b16 %v58
    %v324 = vunpack.c.l.b16 %v59
    %v325 = vunpack.c.l.b16 %v60
    %v326 = vunpack.c.l.b16 %v61
    %v327 = vunpack.c.l.b16 %v62
    %v328 = vunpack.c.l.b16 %v63
    %v329 = vunpack.c.l.b16 %v64
    %v330 = vunpack.c.l.b16 %v65
    %v331 = vunpack.c.l.b16 %v66
    %v332 = vunpack.c.l.b16 %v67
    %v333 = vunpack.c.l.b16 %v68
    %v334 = vunpack.c.l.b16 %v69
    %v335 = vunpack.c.l.b16 %v70
    %v336 = vunpack.c.l.b16 %v71
    %v337 = vpack.c.b16 %v322, %v321
    %v338 = vpack.c.b16 %v324, %v323
    %v339 = vpack.c.b16 %v326, %v325
    %v340 = vpack.c.b16 %v328, %v327
    %v341 = vpack.c.b16 %v330, %v329
    %v342 = vpack.c.b16 %v332, %v331
    %v343 = vpack.c.b16 %v334, %v333
    %v344 = vpack.c.b16 %v336, %v335
    %353 = vmatprep.subr.bf16.mxu0 0
    %354 = vmatpush1.bf16.msra.mxu0 %v297
    %355 = vmatprep.subr.bf16.mxu0 0
    %356 = vmatpush1.bf16.msra.mxu0 %v298
    %357 = vmatprep.subr.bf16.mxu0 0
    %358 = vmatpush1.bf16.msra.mxu0 %v299
    %359 = vmatprep.subr.bf16.mxu0 0
    %360 = vmatpush1.bf16.msra.mxu0 %v300
    %361 = vmatprep.subr.bf16.mxu0 0
    %362 = vmatpush1.bf16.msra.mxu0 %v301
    %363 = vmatprep.subr.bf16.mxu0 0
    %364 = vmatpush1.bf16.msra.mxu0 %v302
    %365 = vmatprep.subr.bf16.mxu0 0
    %366 = vmatpush1.bf16.msra.mxu0 %v303
    %367 = vmatprep.subr.bf16.mxu0 0
    %368 = vmatpush1.bf16.msra.mxu0 %v304
    %369 = vmatprep.subr.bf16.mxu0 0
    %370 = vmatpush1.bf16.msra.mxu0 0
    %371 = vmatprep.subr.bf16.mxu0 0
    %372 = vmatpush1.bf16.msra.mxu0 0
    %373 = vmatprep.subr.bf16.mxu0 0
    %374 = vmatpush1.bf16.msra.mxu0 0
    %375 = vmatprep.subr.bf16.mxu0 0
    %376 = vmatpush1.bf16.msra.mxu0 0
    %377 = vmatprep.subr.bf16.mxu0 0
    %378 = vmatpush1.bf16.msra.mxu0 0
    %379 = vmatprep.subr.bf16.mxu0 0
    %380 = vmatpush1.bf16.msra.mxu0 0
    %381 = vmatprep.subr.bf16.mxu0 0
    %382 = vmatpush1.bf16.msra.mxu0 0
    %383 = vmatprep.subr.bf16.mxu0 0
    %384 = vmatpush1.bf16.msra.mxu0 0
    %385 = vmatprep.mubr.bf16.mxu0 0
    %386 = vmatmul.mubr.bf16.gmra.mrb[0].mxu0 %v337
    %v387 = vpop.f32.mrb[0].mxu0
    %v388 = vadd.f32 0.0, %v387
    %v389 = vpop.f32.mrb[0].mxu0
    %v390 = vpop.f32.mrb[0].mxu0
    %v391 = vadd.f32 0.0, %v390
    %v392 = vpop.f32.mrb[0].mxu0
    %393 = vmatprep.mubr.bf16.mxu0 0
    %394 = vmatmul.mubr.bf16.gmra.mrb[0].mxu0 %v338
    %v395 = vpop.f32.mrb[0].mxu0
    %v396 = vadd.f32 0.0, %v395
    %v397 = vpop.f32.mrb[0].mxu0
    %v398 = vpop.f32.mrb[0].mxu0
    %v399 = vadd.f32 0.0, %v398
    %v400 = vpop.f32.mrb[0].mxu0
    %401 = vmatprep.mubr.bf16.mxu0 0
    %402 = vmatmul.mubr.bf16.gmra.mrb[0].mxu0 %v339
    %v403 = vpop.f32.mrb[0].mxu0
    %v404 = vadd.f32 0.0, %v403
    %v405 = vpop.f32.mrb[0].mxu0
    %v406 = vpop.f32.mrb[0].mxu0
    %v407 = vadd.f32 0.0, %v406
    %v408 = vpop.f32.mrb[0].mxu0
    %409 = vmatprep.mubr.bf16.mxu0 0
    %410 = vmatmul.mubr.bf16.gmra.mrb[0].mxu0 %v340
    %v411 = vpop.f32.mrb[0].mxu0
    %v412 = vadd.f32 0.0, %v411
    %v413 = vpop.f32.mrb[0].mxu0
    %v414 = vpop.f32.mrb[0].mxu0
    %v415 = vadd.f32 0.0, %v414
    %v416 = vpop.f32.mrb[0].mxu0
    %417 = vmatprep.mubr.bf16.mxu0 0
    %418 = vmatmul.mubr.bf16.gmra.mrb[0].mxu0 %v341
    %v419 = vpop.f32.mrb[0].mxu0
    %v420 = vadd.f32 0.0, %v419
    %v421 = vpop.f32.mrb[0].mxu0
    %v422 = vpop.f32.mrb[0].mxu0
    %v423 = vadd.f32 0.0, %v422
    %v424 = vpop.f32.mrb[0].mxu0
    %425 = vmatprep.mubr.bf16.mxu0 0
    %426 = vmatmul.mubr.bf16.gmra.mrb[0].mxu0 %v342
    %v427 = vpop.f32.mrb[0].mxu0
    %v428 = vadd.f32 0.0, %v427
    %v429 = vpop.f32.mrb[0].mxu0
    %v430 = vpop.f32.mrb[0].mxu0
    %v431 = vadd.f32 0.0, %v430
    %v432 = vpop.f32.mrb[0].mxu0
    %433 = vmatprep.mubr.bf16.mxu0 0
    %434 = vmatmul.mubr.bf16.gmra.mrb[0].mxu0 %v343
    %v435 = vpop.f32.mrb[0].mxu0
    %v436 = vadd.f32 0.0, %v435
    %v437 = vpop.f32.mrb[0].mxu0
    %v438 = vpop.f32.mrb[0].mxu0
    %v439 = vadd.f32 0.0, %v438
    %v440 = vpop.f32.mrb[0].mxu0
    %441 = vmatprep.mubr.bf16.mxu0 0
    %442 = vmatmul.mubr.bf16.gmra.mrb[0].mxu0 %v344
    %v443 = vpop.f32.mrb[0].mxu0
    %v444 = vadd.f32 0.0, %v443
    %v445 = vpop.f32.mrb[0].mxu0
    %v446 = vpop.f32.mrb[0].mxu0
    %v447 = vadd.f32 0.0, %v446
    %v448 = vpop.f32.mrb[0].mxu0
    %449 = vdwg.mxu0
    %v450 = vmax.f32 %v388, 0.0
    %v451 = vmax.f32 %v391, 0.0
    %v452 = vmax.f32 %v396, 0.0
    %v453 = vmax.f32 %v399, 0.0
    %v454 = vmax.f32 %v404, 0.0
    %v455 = vmax.f32 %v407, 0.0
    %v456 = vmax.f32 %v412, 0.0
    %v457 = vmax.f32 %v415, 0.0
    %v458 = vmax.f32 %v420, 0.0
    %v459 = vmax.f32 %v423, 0.0
    %v460 = vmax.f32 %v428, 0.0
    %v461 = vmax.f32 %v431, 0.0
    %v462 = vmax.f32 %v436, 0.0
    %v463 = vmax.f32 %v439, 0.0
    %v464 = vmax.f32 %v444, 0.0
    %v465 = vmax.f32 %v447, 0.0
    %v466 = vpack.c.bf16 %v451, %v450
    %v467 = vpack.c.bf16 %v453, %v452
    %v468 = vpack.c.bf16 %v455, %v454
    %v469 = vpack.c.bf16 %v457, %v456
    %v470 = vpack.c.bf16 %v459, %v458
    %v471 = vpack.c.bf16 %v461, %v460
    %v472 = vpack.c.bf16 %v463, %v462
    %v473 = vpack.c.bf16 %v465, %v464
    %s474 = scalar_lea.vmem [#allocation6], 64
    %v475 = vld [vmem:[%s474] sm:$0xf]
    %v476 = vld [vmem:[%s474 + $0x4] sm:$0xf]
    %v477 = vld [vmem:[%s474 + $0x8] sm:$0xf]
    %v478 = vld [vmem:[%s474 + $0xc] sm:$0xf]
    %v479 = vld [vmem:[%s474 + $0x10] sm:$0xf]
    %v480 = vld [vmem:[%s474 + $0x14] sm:$0xf]
    %v481 = vld [vmem:[%s474 + $0x18] sm:$0xf]
    %v482 = vld [vmem:[%s474 + $0x1c] sm:$0xf]
    %v483 = vld [vmem:[%s474 + $0x20] sm:$0xf]
    %v484 = vld [vmem:[%s474 + $0x24] sm:$0xf]
    %v485 = vld [vmem:[%s474 + $0x28] sm:$0xf]
    %v486 = vld [vmem:[%s474 + $0x2c] sm:$0xf]
    %v487 = vld [vmem:[%s474 + $0x30] sm:$0xf]
    %v488 = vld [vmem:[%s474 + $0x34] sm:$0xf]
    %v489 = vld [vmem:[%s474 + $0x38] sm:$0xf]
    %v490 = vld [vmem:[%s474 + $0x3c] sm:$0xf]
    %v507 = vunpack.c.l.b16 %v475
    %v508 = vunpack.c.l.b16 %v476
    %v509 = vunpack.c.l.b16 %v477
    %v510 = vunpack.c.l.b16 %v478
    %v511 = vunpack.c.l.b16 %v479
    %v512 = vunpack.c.l.b16 %v480
    %v513 = vunpack.c.l.b16 %v481
    %v514 = vunpack.c.l.b16 %v482
    %v515 = vunpack.c.l.b16 %v483
    %v516 = vunpack.c.l.b16 %v484
    %v517 = vunpack.c.l.b16 %v485
    %v518 = vunpack.c.l.b16 %v486
    %v519 = vunpack.c.l.b16 %v487
    %v520 = vunpack.c.l.b16 %v488
    %v521 = vunpack.c.l.b16 %v489
    %v522 = vunpack.c.l.b16 %v490
    %v523 = vpack.c.b16 %v508, %v507
    %v524 = vpack.c.b16 %v510, %v509
    %v525 = vpack.c.b16 %v512, %v511
    %v526 = vpack.c.b16 %v514, %v513
    %v527 = vpack.c.b16 %v516, %v515
    %v528 = vpack.c.b16 %v518, %v517
    %v529 = vpack.c.b16 %v520, %v519
    %v530 = vpack.c.b16 %v522, %v521
    %539 = vmatprep.subr.bf16.mxu0 0
    %540 = vmatpush1.bf16.msra.mxu0 %v523
    %541 = vmatprep.subr.bf16.mxu0 0
    %542 = vmatpush1.bf16.msra.mxu0 %v524
    %543 = vmatprep.subr.bf16.mxu0 0
    %544 = vmatpush1.bf16.msra.mxu0 %v525
    %545 = vmatprep.subr.bf16.mxu0 0
    %546 = vmatpush1.bf16.msra.mxu0 %v526
    %547 = vmatprep.subr.bf16.mxu0 0
    %548 = vmatpush1.bf16.msra.mxu0 %v527
    %549 = vmatprep.subr.bf16.mxu0 0
    %550 = vmatpush1.bf16.msra.mxu0 %v528
    %551 = vmatprep.subr.bf16.mxu0 0
    %552 = vmatpush1.bf16.msra.mxu0 %v529
    %553 = vmatprep.subr.bf16.mxu0 0
    %554 = vmatpush1.bf16.msra.mxu0 %v530
    %555 = vmatprep.subr.bf16.mxu0 0
    %556 = vmatpush1.bf16.msra.mxu0 0
    %557 = vmatprep.subr.bf16.mxu0 0
    %558 = vmatpush1.bf16.msra.mxu0 0
    %559 = vmatprep.subr.bf16.mxu0 0
    %560 = vmatpush1.bf16.msra.mxu0 0
    %561 = vmatprep.subr.bf16.mxu0 0
    %562 = vmatpush1.bf16.msra.mxu0 0
    %563 = vmatprep.subr.bf16.mxu0 0
    %564 = vmatpush1.bf16.msra.mxu0 0
    %565 = vmatprep.subr.bf16.mxu0 0
    %566 = vmatpush1.bf16.msra.mxu0 0
    %567 = vmatprep.subr.bf16.mxu0 0
    %568 = vmatpush1.bf16.msra.mxu0 0
    %569 = vmatprep.subr.bf16.mxu0 0
    %570 = vmatpush1.bf16.msra.mxu0 0
    %571 = vmatprep.mubr.bf16.mxu0 0
    %572 = vmatmul.mubr.bf16.gmra.mrb[0].mxu0 %v466
    %v573 = vpop.f32.mrb[0].mxu0
    %v574 = vadd.f32 0.0, %v573
    %v575 = vpop.f32.mrb[0].mxu0
    %v576 = vpop.f32.mrb[0].mxu0
    %v577 = vadd.f32 0.0, %v576
    %v578 = vpop.f32.mrb[0].mxu0
    %579 = vmatprep.mubr.bf16.mxu0 0
    %580 = vmatmul.mubr.bf16.gmra.mrb[0].mxu0 %v467
    %v581 = vpop.f32.mrb[0].mxu0
    %v582 = vadd.f32 0.0, %v581
    %v583 = vpop.f32.mrb[0].mxu0
    %v584 = vpop.f32.mrb[0].mxu0
    %v585 = vadd.f32 0.0, %v584
    %v586 = vpop.f32.mrb[0].mxu0
    %587 = vmatprep.mubr.bf16.mxu0 0
    %588 = vmatmul.mubr.bf16.gmra.mrb[0].mxu0 %v468
    %v589 = vpop.f32.mrb[0].mxu0
    %v590 = vadd.f32 0.0, %v589
    %v591 = vpop.f32.mrb[0].mxu0
    %v592 = vpop.f32.mrb[0].mxu0
    %v593 = vadd.f32 0.0, %v592
    %v594 = vpop.f32.mrb[0].mxu0
    %595 = vmatprep.mubr.bf16.mxu0 0
    %596 = vmatmul.mubr.bf16.gmra.mrb[0].mxu0 %v469
    %v597 = vpop.f32.mrb[0].mxu0
    %v598 = vadd.f32 0.0, %v597
    %v599 = vpop.f32.mrb[0].mxu0
    %v600 = vpop.f32.mrb[0].mxu0
    %v601 = vadd.f32 0.0, %v600
    %v602 = vpop.f32.mrb[0].mxu0
    %603 = vmatprep.mubr.bf16.mxu0 0
    %604 = vmatmul.mubr.bf16.gmra.mrb[0].mxu0 %v470
    %v605 = vpop.f32.mrb[0].mxu0
    %v606 = vadd.f32 0.0, %v605
    %v607 = vpop.f32.mrb[0].mxu0
    %v608 = vpop.f32.mrb[0].mxu0
    %v609 = vadd.f32 0.0, %v608
    %v610 = vpop.f32.mrb[0].mxu0
    %611 = vmatprep.mubr.bf16.mxu0 0
    %612 = vmatmul.mubr.bf16.gmra.mrb[0].mxu0 %v471
    %v613 = vpop.f32.mrb[0].mxu0
    %v614 = vadd.f32 0.0, %v613
    %v615 = vpop.f32.mrb[0].mxu0
    %v616 = vpop.f32.mrb[0].mxu0
    %v617 = vadd.f32 0.0, %v616
    %v618 = vpop.f32.mrb[0].mxu0
    %619 = vmatprep.mubr.bf16.mxu0 0
    %620 = vmatmul.mubr.bf16.gmra.mrb[0].mxu0 %v472
    %v621 = vpop.f32.mrb[0].mxu0
    %v622 = vadd.f32 0.0, %v621
    %v623 = vpop.f32.mrb[0].mxu0
    %v624 = vpop.f32.mrb[0].mxu0
    %v625 = vadd.f32 0.0, %v624
    %v626 = vpop.f32.mrb[0].mxu0
    %627 = vmatprep.mubr.bf16.mxu0 0
    %628 = vmatmul.mubr.bf16.gmra.mrb[0].mxu0 %v473
    %v629 = vpop.f32.mrb[0].mxu0
    %v630 = vadd.f32 0.0, %v629
    %v631 = vpop.f32.mrb[0].mxu0
    %v632 = vpop.f32.mrb[0].mxu0
    %v633 = vadd.f32 0.0, %v632
    %v634 = vpop.f32.mrb[0].mxu0
    %635 = vdwg.mxu0
    %v636 = vpack.c.bf16 %v577, %v574
    %v637 = vpack.c.bf16 %v585, %v582
    %v638 = vpack.c.bf16 %v593, %v590
    %v639 = vpack.c.bf16 %v601, %v598
    %v640 = vpack.c.bf16 %v609, %v606
    %v641 = vpack.c.bf16 %v617, %v614
    %v642 = vpack.c.bf16 %v625, %v622
    %v643 = vpack.c.bf16 %v633, %v630
    %644 = vmatprep.subr.bf16.mxu0 0
    %645 = vmatpush1.bf16.msra.mxu0 %v636
    %646 = vmatprep.subr.bf16.mxu0 0
    %647 = vmatpush1.bf16.msra.mxu0 %v637
    %648 = vmatprep.subr.bf16.mxu0 0
    %649 = vmatpush1.bf16.msra.mxu0 %v638
    %650 = vmatprep.subr.bf16.mxu0 0
    %651 = vmatpush1.bf16.msra.mxu0 %v639
    %652 = vmatprep.subr.bf16.mxu0 0
    %653 = vmatpush1.bf16.msra.mxu0 %v640
    %654 = vmatprep.subr.bf16.mxu0 0
    %655 = vmatpush1.bf16.msra.mxu0 %v641
    %656 = vmatprep.subr.bf16.mxu0 0
    %657 = vmatpush1.bf16.msra.mxu0 %v642
    %658 = vmatprep.subr.bf16.mxu0 0
    %659 = vmatpush1.bf16.msra.mxu0 %v643
    %660 = vmatprep.subr.bf16.mxu0 0
    %661 = vmatpush1.bf16.msra.mxu0 0
    %662 = vmatprep.subr.bf16.mxu0 0
    %663 = vmatpush1.bf16.msra.mxu0 0
    %664 = vmatprep.subr.bf16.mxu0 0
    %665 = vmatpush1.bf16.msra.mxu0 0
    %666 = vmatprep.subr.bf16.mxu0 0
    %667 = vmatpush1.bf16.msra.mxu0 0
    %668 = vmatprep.subr.bf16.mxu0 0
    %669 = vmatpush1.bf16.msra.mxu0 0
    %670 = vmatprep.subr.bf16.mxu0 0
    %671 = vmatpush1.bf16.msra.mxu0 0
    %672 = vmatprep.subr.bf16.mxu0 0
    %673 = vmatpush1.bf16.msra.mxu0 0
    %674 = vmatprep.subr.bf16.mxu0 0
    %675 = vmatpush1.bf16.msra.mxu0 0
    %676 = vmatprep.mubr.bf16.mxu0 0
    %677 = vmatmul.mubr.bf16.gmra.mrb[0].mxu0 %v337
    %v678 = vpop.f32.mrb[0].mxu0
    %v679 = vadd.f32 0.0, %v678
    %v680 = vpop.f32.mrb[0].mxu0
    %v681 = vpop.f32.mrb[0].mxu0
    %v682 = vadd.f32 0.0, %v681
    %v683 = vpop.f32.mrb[0].mxu0
    %684 = vmatprep.mubr.bf16.mxu0 0
    %685 = vmatmul.mubr.bf16.gmra.mrb[0].mxu0 %v338
    %v686 = vpop.f32.mrb[0].mxu0
    %v687 = vadd.f32 0.0, %v686
    %v688 = vpop.f32.mrb[0].mxu0
    %v689 = vpop.f32.mrb[0].mxu0
    %v690 = vadd.f32 0.0, %v689
    %v691 = vpop.f32.mrb[0].mxu0
    %692 = vmatprep.mubr.bf16.mxu0 0
    %693 = vmatmul.mubr.bf16.gmra.mrb[0].mxu0 %v339
    %v694 = vpop.f32.mrb[0].mxu0
    %v695 = vadd.f32 0.0, %v694
    %v696 = vpop.f32.mrb[0].mxu0
    %v697 = vpop.f32.mrb[0].mxu0
    %v698 = vadd.f32 0.0, %v697
    %v699 = vpop.f32.mrb[0].mxu0
    %700 = vmatprep.mubr.bf16.mxu0 0
    %701 = vmatmul.mubr.bf16.gmra.mrb[0].mxu0 %v340
    %v702 = vpop.f32.mrb[0].mxu0
    %v703 = vadd.f32 0.0, %v702
    %v704 = vpop.f32.mrb[0].mxu0
    %v705 = vpop.f32.mrb[0].mxu0
    %v706 = vadd.f32 0.0, %v705
    %v707 = vpop.f32.mrb[0].mxu0
    %708 = vmatprep.mubr.bf16.mxu0 0
    %709 = vmatmul.mubr.bf16.gmra.mrb[0].mxu0 %v341
    %v710 = vpop.f32.mrb[0].mxu0
    %v711 = vadd.f32 0.0, %v710
    %v712 = vpop.f32.mrb[0].mxu0
    %v713 = vpop.f32.mrb[0].mxu0
    %v714 = vadd.f32 0.0, %v713
    %v715 = vpop.f32.mrb[0].mxu0
    %716 = vmatprep.mubr.bf16.mxu0 0
    %717 = vmatmul.mubr.bf16.gmra.mrb[0].mxu0 %v342
    %v718 = vpop.f32.mrb[0].mxu0
    %v719 = vadd.f32 0.0, %v718
    %v720 = vpop.f32.mrb[0].mxu0
    %v721 = vpop.f32.mrb[0].mxu0
    %v722 = vadd.f32 0.0, %v721
    %v723 = vpop.f32.mrb[0].mxu0
    %724 = vmatprep.mubr.bf16.mxu0 0
    %725 = vmatmul.mubr.bf16.gmra.mrb[0].mxu0 %v343
    %v726 = vpop.f32.mrb[0].mxu0
    %v727 = vadd.f32 0.0, %v726
    %v728 = vpop.f32.mrb[0].mxu0
    %v729 = vpop.f32.mrb[0].mxu0
    %v730 = vadd.f32 0.0, %v729
    %v731 = vpop.f32.mrb[0].mxu0
    %732 = vmatprep.mubr.bf16.mxu0 0
    %733 = vmatmul.mubr.bf16.gmra.mrb[0].mxu0 %v344
    %v734 = vpop.f32.mrb[0].mxu0
    %v735 = vadd.f32 0.0, %v734
    %v736 = vpop.f32.mrb[0].mxu0
    %v737 = vpop.f32.mrb[0].mxu0
    %v738 = vadd.f32 0.0, %v737
    %v739 = vpop.f32.mrb[0].mxu0
    %740 = vdwg.mxu0
    %v741 = vmax.f32 %v679, 0.0
    %v742 = vmax.f32 %v682, 0.0
    %v743 = vmax.f32 %v687, 0.0
    %v744 = vmax.f32 %v690, 0.0
    %v745 = vmax.f32 %v695, 0.0
    %v746 = vmax.f32 %v698, 0.0
    %v747 = vmax.f32 %v703, 0.0
    %v748 = vmax.f32 %v706, 0.0
    %v749 = vmax.f32 %v711, 0.0
    %v750 = vmax.f32 %v714, 0.0
    %v751 = vmax.f32 %v719, 0.0
    %v752 = vmax.f32 %v722, 0.0
    %v753 = vmax.f32 %v727, 0.0
    %v754 = vmax.f32 %v730, 0.0
    %v755 = vmax.f32 %v735, 0.0
    %v756 = vmax.f32 %v738, 0.0
    %v757 = vpack.c.bf16 %v742, %v741
    %v758 = vpack.c.bf16 %v744, %v743
    %v759 = vpack.c.bf16 %v746, %v745
    %v760 = vpack.c.bf16 %v748, %v747
    %v761 = vpack.c.bf16 %v750, %v749
    %v762 = vpack.c.bf16 %v752, %v751
    %v763 = vpack.c.bf16 %v754, %v753
    %v764 = vpack.c.bf16 %v756, %v755
    %s765 = scalar_lea.vmem [#allocation6], 128
    %v766 = vld [vmem:[%s765] sm:$0xf]
    %v767 = vld [vmem:[%s765 + $0x4] sm:$0xf]
    %v768 = vld [vmem:[%s765 + $0x8] sm:$0xf]
    %v769 = vld [vmem:[%s765 + $0xc] sm:$0xf]
    %v770 = vld [vmem:[%s765 + $0x10] sm:$0xf]
    %v771 = vld [vmem:[%s765 + $0x14] sm:$0xf]
    %v772 = vld [vmem:[%s765 + $0x18] sm:$0xf]
    %v773 = vld [vmem:[%s765 + $0x1c] sm:$0xf]
    %v774 = vld [vmem:[%s765 + $0x20] sm:$0xf]
    %v775 = vld [vmem:[%s765 + $0x24] sm:$0xf]
    %v776 = vld [vmem:[%s765 + $0x28] sm:$0xf]
    %v777 = vld [vmem:[%s765 + $0x2c] sm:$0xf]
    %v778 = vld [vmem:[%s765 + $0x30] sm:$0xf]
    %v779 = vld [vmem:[%s765 + $0x34] sm:$0xf]
    %v780 = vld [vmem:[%s765 + $0x38] sm:$0xf]
    %v781 = vld [vmem:[%s765 + $0x3c] sm:$0xf]
    %v798 = vunpack.c.l.b16 %v766
    %v799 = vunpack.c.l.b16 %v767
    %v800 = vunpack.c.l.b16 %v768
    %v801 = vunpack.c.l.b16 %v769
    %v802 = vunpack.c.l.b16 %v770
    %v803 = vunpack.c.l.b16 %v771
    %v804 = vunpack.c.l.b16 %v772
    %v805 = vunpack.c.l.b16 %v773
    %v806 = vunpack.c.l.b16 %v774
    %v807 = vunpack.c.l.b16 %v775
    %v808 = vunpack.c.l.b16 %v776
    %v809 = vunpack.c.l.b16 %v777
    %v810 = vunpack.c.l.b16 %v778
    %v811 = vunpack.c.l.b16 %v779
    %v812 = vunpack.c.l.b16 %v780
    %v813 = vunpack.c.l.b16 %v781
    %v814 = vpack.c.b16 %v799, %v798
    %v815 = vpack.c.b16 %v801, %v800
    %v816 = vpack.c.b16 %v803, %v802
    %v817 = vpack.c.b16 %v805, %v804
    %v818 = vpack.c.b16 %v807, %v806
    %v819 = vpack.c.b16 %v809, %v808
    %v820 = vpack.c.b16 %v811, %v810
    %v821 = vpack.c.b16 %v813, %v812
    %830 = vmatprep.subr.bf16.mxu0 0
    %831 = vmatpush1.bf16.msra.mxu0 %v814
    %832 = vmatprep.subr.bf16.mxu0 0
    %833 = vmatpush1.bf16.msra.mxu0 %v815
    %834 = vmatprep.subr.bf16.mxu0 0
    %835 = vmatpush1.bf16.msra.mxu0 %v816
    %836 = vmatprep.subr.bf16.mxu0 0
    %837 = vmatpush1.bf16.msra.mxu0 %v817
    %838 = vmatprep.subr.bf16.mxu0 0
    %839 = vmatpush1.bf16.msra.mxu0 %v818
    %840 = vmatprep.subr.bf16.mxu0 0
    %841 = vmatpush1.bf16.msra.mxu0 %v819
    %842 = vmatprep.subr.bf16.mxu0 0
    %843 = vmatpush1.bf16.msra.mxu0 %v820
    %844 = vmatprep.subr.bf16.mxu0 0
    %845 = vmatpush1.bf16.msra.mxu0 %v821
    %846 = vmatprep.subr.bf16.mxu0 0
    %847 = vmatpush1.bf16.msra.mxu0 0
    %848 = vmatprep.subr.bf16.mxu0 0
    %849 = vmatpush1.bf16.msra.mxu0 0
    %850 = vmatprep.subr.bf16.mxu0 0
    %851 = vmatpush1.bf16.msra.mxu0 0
    %852 = vmatprep.subr.bf16.mxu0 0
    %853 = vmatpush1.bf16.msra.mxu0 0
    %854 = vmatprep.subr.bf16.mxu0 0
    %855 = vmatpush1.bf16.msra.mxu0 0
    %856 = vmatprep.subr.bf16.mxu0 0
    %857 = vmatpush1.bf16.msra.mxu0 0
    %858 = vmatprep.subr.bf16.mxu0 0
    %859 = vmatpush1.bf16.msra.mxu0 0
    %860 = vmatprep.subr.bf16.mxu0 0
    %861 = vmatpush1.bf16.msra.mxu0 0
    %862 = vmatprep.mubr.bf16.mxu0 0
    %863 = vmatmul.mubr.bf16.gmra.mrb[0].mxu0 %v757
    %v864 = vpop.f32.mrb[0].mxu0
    %v865 = vadd.f32 0.0, %v864
    %v866 = vpop.f32.mrb[0].mxu0
    %v867 = vpop.f32.mrb[0].mxu0
    %v868 = vadd.f32 0.0, %v867
    %v869 = vpop.f32.mrb[0].mxu0
    %870 = vmatprep.mubr.bf16.mxu0 0
    %871 = vmatmul.mubr.bf16.gmra.mrb[0].mxu0 %v758
    %v872 = vpop.f32.mrb[0].mxu0
    %v873 = vadd.f32 0.0, %v872
    %v874 = vpop.f32.mrb[0].mxu0
    %v875 = vpop.f32.mrb[0].mxu0
    %v876 = vadd.f32 0.0, %v875
    %v877 = vpop.f32.mrb[0].mxu0
    %878 = vmatprep.mubr.bf16.mxu0 0
    %879 = vmatmul.mubr.bf16.gmra.mrb[0].mxu0 %v759
    %v880 = vpop.f32.mrb[0].mxu0
    %v881 = vadd.f32 0.0, %v880
    %v882 = vpop.f32.mrb[0].mxu0
    %v883 = vpop.f32.mrb[0].mxu0
    %v884 = vadd.f32 0.0, %v883
    %v885 = vpop.f32.mrb[0].mxu0
    %886 = vmatprep.mubr.bf16.mxu0 0
    %887 = vmatmul.mubr.bf16.gmra.mrb[0].mxu0 %v760
    %v888 = vpop.f32.mrb[0].mxu0
    %v889 = vadd.f32 0.0, %v888
    %v890 = vpop.f32.mrb[0].mxu0
    %v891 = vpop.f32.mrb[0].mxu0
    %v892 = vadd.f32 0.0, %v891
    %v893 = vpop.f32.mrb[0].mxu0
    %894 = vmatprep.mubr.bf16.mxu0 0
    %895 = vmatmul.mubr.bf16.gmra.mrb[0].mxu0 %v761
    %v896 = vpop.f32.mrb[0].mxu0
    %v897 = vadd.f32 0.0, %v896
    %v898 = vpop.f32.mrb[0].mxu0
    %v899 = vpop.f32.mrb[0].mxu0
    %v900 = vadd.f32 0.0, %v899
    %v901 = vpop.f32.mrb[0].mxu0
    %902 = vmatprep.mubr.bf16.mxu0 0
    %903 = vmatmul.mubr.bf16.gmra.mrb[0].mxu0 %v762
    %v904 = vpop.f32.mrb[0].mxu0
    %v905 = vadd.f32 0.0, %v904
    %v906 = vpop.f32.mrb[0].mxu0
    %v907 = vpop.f32.mrb[0].mxu0
    %v908 = vadd.f32 0.0, %v907
    %v909 = vpop.f32.mrb[0].mxu0
    %910 = vmatprep.mubr.bf16.mxu0 0
    %911 = vmatmul.mubr.bf16.gmra.mrb[0].mxu0 %v763
    %v912 = vpop.f32.mrb[0].mxu0
    %v913 = vadd.f32 0.0, %v912
    %v914 = vpop.f32.mrb[0].mxu0
    %v915 = vpop.f32.mrb[0].mxu0
    %v916 = vadd.f32 0.0, %v915
    %v917 = vpop.f32.mrb[0].mxu0
    %918 = vmatprep.mubr.bf16.mxu0 0
    %919 = vmatmul.mubr.bf16.gmra.mrb[0].mxu0 %v764
    %v920 = vpop.f32.mrb[0].mxu0
    %v921 = vadd.f32 0.0, %v920
    %v922 = vpop.f32.mrb[0].mxu0
    %v923 = vpop.f32.mrb[0].mxu0
    %v924 = vadd.f32 0.0, %v923
    %v925 = vpop.f32.mrb[0].mxu0
    %926 = vdwg.mxu0
    %v927 = vpack.c.bf16 %v868, %v865
    %v928 = vpack.c.bf16 %v876, %v873
    %v929 = vpack.c.bf16 %v884, %v881
    %v930 = vpack.c.bf16 %v892, %v889
    %v931 = vpack.c.bf16 %v900, %v897
    %v932 = vpack.c.bf16 %v908, %v905
    %v933 = vpack.c.bf16 %v916, %v913
    %v934 = vpack.c.bf16 %v924, %v921
    %935 = vmatprep.subr.bf16.mxu0 0
    %936 = vmatpush1.bf16.msra.mxu0 %v927
    %937 = vmatprep.subr.bf16.mxu0 0
    %938 = vmatpush1.bf16.msra.mxu0 %v928
    %939 = vmatprep.subr.bf16.mxu0 0
    %940 = vmatpush1.bf16.msra.mxu0 %v929
    %941 = vmatprep.subr.bf16.mxu0 0
    %942 = vmatpush1.bf16.msra.mxu0 %v930
    %943 = vmatprep.subr.bf16.mxu0 0
    %944 = vmatpush1.bf16.msra.mxu0 %v931
    %945 = vmatprep.subr.bf16.mxu0 0
    %946 = vmatpush1.bf16.msra.mxu0 %v932
    %947 = vmatprep.subr.bf16.mxu0 0
    %948 = vmatpush1.bf16.msra.mxu0 %v933
    %949 = vmatprep.subr.bf16.mxu0 0
    %950 = vmatpush1.bf16.msra.mxu0 %v934
    %951 = vmatprep.subr.bf16.mxu0 0
    %952 = vmatpush1.bf16.msra.mxu0 0
    %953 = vmatprep.subr.bf16.mxu0 0
    %954 = vmatpush1.bf16.msra.mxu0 0
    %955 = vmatprep.subr.bf16.mxu0 0
    %956 = vmatpush1.bf16.msra.mxu0 0
    %957 = vmatprep.subr.bf16.mxu0 0
    %958 = vmatpush1.bf16.msra.mxu0 0
    %959 = vmatprep.subr.bf16.mxu0 0
    %960 = vmatpush1.bf16.msra.mxu0 0
    %961 = vmatprep.subr.bf16.mxu0 0
    %962 = vmatpush1.bf16.msra.mxu0 0
    %963 = vmatprep.subr.bf16.mxu0 0
    %964 = vmatpush1.bf16.msra.mxu0 0
    %965 = vmatprep.subr.bf16.mxu0 0
    %966 = vmatpush1.bf16.msra.mxu0 0
    %967 = vmatprep.mubr.bf16.mxu0 0
    %968 = vmatmul.mubr.bf16.gmra.mrb[0].mxu0 %v337
    %v969 = vpop.f32.mrb[0].mxu0
    %v970 = vadd.f32 0.0, %v969
    %v971 = vpop.f32.mrb[0].mxu0
    %v972 = vpop.f32.mrb[0].mxu0
    %v973 = vadd.f32 0.0, %v972
    %v974 = vpop.f32.mrb[0].mxu0
    %975 = vmatprep.mubr.bf16.mxu0 0
    %976 = vmatmul.mubr.bf16.gmra.mrb[0].mxu0 %v338
    %v977 = vpop.f32.mrb[0].mxu0
    %v978 = vadd.f32 0.0, %v977
    %v979 = vpop.f32.mrb[0].mxu0
    %v980 = vpop.f32.mrb[0].mxu0
    %v981 = vadd.f32 0.0, %v980
    %v982 = vpop.f32.mrb[0].mxu0
    %983 = vmatprep.mubr.bf16.mxu0 0
    %984 = vmatmul.mubr.bf16.gmra.mrb[0].mxu0 %v339
    %v985 = vpop.f32.mrb[0].mxu0
    %v986 = vadd.f32 0.0, %v985
    %v987 = vpop.f32.mrb[0].mxu0
    %v988 = vpop.f32.mrb[0].mxu0
    %v989 = vadd.f32 0.0, %v988
    %v990 = vpop.f32.mrb[0].mxu0
    %991 = vmatprep.mubr.bf16.mxu0 0
    %992 = vmatmul.mubr.bf16.gmra.mrb[0].mxu0 %v340
    %v993 = vpop.f32.mrb[0].mxu0
    %v994 = vadd.f32 0.0, %v993
    %v995 = vpop.f32.mrb[0].mxu0
    %v996 = vpop.f32.mrb[0].mxu0
    %v997 = vadd.f32 0.0, %v996
    %v998 = vpop.f32.mrb[0].mxu0
    %999 = vmatprep.mubr.bf16.mxu0 0
    %1000 = vmatmul.mubr.bf16.gmra.mrb[0].mxu0 %v341
    %v1001 = vpop.f32.mrb[0].mxu0
    %v1002 = vadd.f32 0.0, %v1001
    %v1003 = vpop.f32.mrb[0].mxu0
    %v1004 = vpop.f32.mrb[0].mxu0
    %v1005 = vadd.f32 0.0, %v1004
    %v1006 = vpop.f32.mrb[0].mxu0
    %1007 = vmatprep.mubr.bf16.mxu0 0
    %1008 = vmatmul.mubr.bf16.gmra.mrb[0].mxu0 %v342
    %v1009 = vpop.f32.mrb[0].mxu0
    %v1010 = vadd.f32 0.0, %v1009
    %v1011 = vpop.f32.mrb[0].mxu0
    %v1012 = vpop.f32.mrb[0].mxu0
    %v1013 = vadd.f32 0.0, %v1012
    %v1014 = vpop.f32.mrb[0].mxu0
    %1015 = vmatprep.mubr.bf16.mxu0 0
    %1016 = vmatmul.mubr.bf16.gmra.mrb[0].mxu0 %v343
    %v1017 = vpop.f32.mrb[0].mxu0
    %v1018 = vadd.f32 0.0, %v1017
    %v1019 = vpop.f32.mrb[0].mxu0
    %v1020 = vpop.f32.mrb[0].mxu0
    %v1021 = vadd.f32 0.0, %v1020
    %v1022 = vpop.f32.mrb[0].mxu0
    %1023 = vmatprep.mubr.bf16.mxu0 0
    %1024 = vmatmul.mubr.bf16.gmra.mrb[0].mxu0 %v344
    %v1025 = vpop.f32.mrb[0].mxu0
    %v1026 = vadd.f32 0.0, %v1025
    %v1027 = vpop.f32.mrb[0].mxu0
    %v1028 = vpop.f32.mrb[0].mxu0
    %v1029 = vadd.f32 0.0, %v1028
    %v1030 = vpop.f32.mrb[0].mxu0
    %1031 = vdwg.mxu0
    %v1032 = vpack.c.bf16 %v973, %v970
    %v1033 = vpack.c.bf16 %v981, %v978
    %v1034 = vpack.c.bf16 %v989, %v986
    %v1035 = vpack.c.bf16 %v997, %v994
    %v1036 = vpack.c.bf16 %v1005, %v1002
    %v1037 = vpack.c.bf16 %v1013, %v1010
    %v1038 = vpack.c.bf16 %v1021, %v1018
    %v1039 = vpack.c.bf16 %v1029, %v1026
    %v1048 = vunpack.c.l.b16 %v1032
    %v1049 = vunpack.c.h.b16 %v1032
    %v1050 = vunpack.c.l.b16 %v1033
    %v1051 = vunpack.c.h.b16 %v1033
    %v1052 = vunpack.c.l.b16 %v1034
    %v1053 = vunpack.c.h.b16 %v1034
    %v1054 = vunpack.c.l.b16 %v1035
    %v1055 = vunpack.c.h.b16 %v1035
    %v1056 = vunpack.c.l.b16 %v1036
    %v1057 = vunpack.c.h.b16 %v1036
    %v1058 = vunpack.c.l.b16 %v1037
    %v1059 = vunpack.c.h.b16 %v1037
    %v1060 = vunpack.c.l.b16 %v1038
    %v1061 = vunpack.c.h.b16 %v1038
    %v1062 = vunpack.c.l.b16 %v1039
    %v1063 = vunpack.c.h.b16 %v1039
    %v1064 = vpack.c.b16 %v1048, %v1048
    %v1065 = vpack.c.b16 %v1049, %v1049
    %v1066 = vpack.c.b16 %v1050, %v1050
    %v1067 = vpack.c.b16 %v1051, %v1051
    %v1068 = vpack.c.b16 %v1052, %v1052
    %v1069 = vpack.c.b16 %v1053, %v1053
    %v1070 = vpack.c.b16 %v1054, %v1054
    %v1071 = vpack.c.b16 %v1055, %v1055
    %v1072 = vpack.c.b16 %v1056, %v1056
    %v1073 = vpack.c.b16 %v1057, %v1057
    %v1074 = vpack.c.b16 %v1058, %v1058
    %v1075 = vpack.c.b16 %v1059, %v1059
    %v1076 = vpack.c.b16 %v1060, %v1060
    %v1077 = vpack.c.b16 %v1061, %v1061
    %v1078 = vpack.c.b16 %v1062, %v1062
    %v1079 = vpack.c.b16 %v1063, %v1063
    %1096 = vst [vmem:[%s3] sm:$0xf] %v1064
    %1097 = vst [vmem:[%s3 + $0x4] sm:$0xf] %v1065
    %1098 = vst [vmem:[%s3 + $0x8] sm:$0xf] %v1066
    %1099 = vst [vmem:[%s3 + $0xc] sm:$0xf] %v1067
    %1100 = vst [vmem:[%s3 + $0x10] sm:$0xf] %v1068
    %1101 = vst [vmem:[%s3 + $0x14] sm:$0xf] %v1069
    %1102 = vst [vmem:[%s3 + $0x18] sm:$0xf] %v1070
    %1103 = vst [vmem:[%s3 + $0x1c] sm:$0xf] %v1071
    %1104 = vst [vmem:[%s3 + $0x20] sm:$0xf] %v1072
    %1105 = vst [vmem:[%s3 + $0x24] sm:$0xf] %v1073
    %1106 = vst [vmem:[%s3 + $0x28] sm:$0xf] %v1074
    %1107 = vst [vmem:[%s3 + $0x2c] sm:$0xf] %v1075
    %1108 = vst [vmem:[%s3 + $0x30] sm:$0xf] %v1076
    %1109 = vst [vmem:[%s3 + $0x34] sm:$0xf] %v1077
    %1110 = vst [vmem:[%s3 + $0x38] sm:$0xf] %v1078
    %1111 = vst [vmem:[%s3 + $0x3c] sm:$0xf] %v1079
    // Predicated region
    $region26: #{gcn_forward.1} parent=1 // pred_check
      _
    $region27: #{gcn_forward.1} parent=1 // pred_check_branch
      %1113 = sbr.rel (0) target = $region29
    $region28: #{gcn_forward.1} parent=1 // pred_region
      _
    $region29: #{gcn_forward.1} parent=1 // pred_fallthru
      _
    // Predicated region
    $region30: #{gcn_forward.1} parent=1 // pred_check
      _
    $region31: #{gcn_forward.1} parent=1 // pred_check_branch
      %1115 = sbr.rel (0) target = $region33
    $region32: #{gcn_forward.1} parent=1 // pred_region
      _
    $region33: #{gcn_forward.1} parent=1 // pred_fallthru
      _
    %1116 = vsyncpa [#allocation3], 1
    %1117 = vsyncpa [#allocation5], 1

</llo_original>
